<compile_context>
chip_gen: v5e
topology: v5e:2x2
jax: 0.10.0
libtpu: 0.0.40
codegen_flags: <defaults>
</compile_context>

<pallas_src>
import math

import jax
import jax.numpy as jnp
from jax.experimental import pallas as pl
from jax.experimental.pallas import tpu as pltpu

_INV_SQRT2 = 1.0 / math.sqrt(2.0)


def mlp_kernel(x_ref, w1_ref, b1_ref, w2_ref, b2_ref, o_ref, acc_ref):
    # grid = (row_tiles, hidden_tiles); axis 1 is the hidden-dim reduction.
    # x_ref: (tm, in_p), w1_ref: (in_p, tk), b1_ref: (1, tk)
    # w2_ref: (tk, out_p), b2_ref: (1, out_p), o_ref: (tm, out_p)
    # acc_ref: (tm, out_p) f32 scratch accumulator.
    k = pl.program_id(1)

    @pl.when(k == 0)
    def _init():
        acc_ref[...] = jnp.zeros_like(acc_ref)

    # First matmul on the MXU, f32 accumulation.
    h = jnp.dot(x_ref[...], w1_ref[...], preferred_element_type=jnp.float32)
    # Bias + exact (erf-based) GELU in f32 — matches torch.nn.GELU default.
    h = h + b1_ref[...]
    h = 0.5 * h * (1.0 + jax.lax.erf(h * _INV_SQRT2))
    # Second matmul: accumulate this hidden chunk's contribution.
    acc_ref[...] += jnp.dot(
        h.astype(w2_ref.dtype), w2_ref[...], preferred_element_type=jnp.float32
    )

    @pl.when(k == pl.num_programs(1) - 1)
    def _finalize():
        o_ref[...] = (acc_ref[...] + b2_ref[...]).astype(o_ref.dtype)


def _round_up(v, m):
    return (v + m - 1) // m * m


def mlp_pallas(x, w1, b1, w2, b2, *, tm=256, tk=512, compute_dtype=None):
    """Fused Linear->GELU->Linear.

    x: (B, T, in_f); w1: (in_f, hid); b1: (hid,); w2: (hid, out_f); b2: (out_f,).
    Weights are stored transposed relative to PyTorch nn.Linear.
    compute_dtype: optional dtype (e.g. jnp.bfloat16) for MXU inputs; f32 accum.
    """
    B, T, in_f = x.shape
    hid = w1.shape[1]
    out_f = w2.shape[1]
    out_dtype = x.dtype
    M = B * T

    # ---- pad everything to MXU/vreg-friendly shapes -----------------------
    in_p = _round_up(in_f, 128)     # lane-dense loads
    out_p = _round_up(out_f, 128)   # lane-dense stores
    hid_p = _round_up(hid, 128)

    # Row tile: large, multiple of 8, never larger than the row count; rows
    # are zero-padded to a multiple of tm (handles odd batch/token counts).
    tm = min(tm, _round_up(M, 8))
    m_p = _round_up(M, tm)

    # Hidden (reduction) tile: multiple of 128 that divides the padded hidden.
    tk = min(tk, hid_p)
    hid_p = _round_up(hid_p, tk)

    x2d = jnp.pad(x.reshape(M, in_f), ((0, m_p - M), (0, in_p - in_f)))
    w1p = jnp.pad(w1, ((0, in_p - in_f), (0, hid_p - hid)))
    b1p = jnp.pad(b1, (0, hid_p - hid)).reshape(1, hid_p).astype(jnp.float32)
    w2p = jnp.pad(w2, ((0, hid_p - hid), (0, out_p - out_f)))
    b2p = jnp.pad(b2, (0, out_p - out_f)).reshape(1, out_p).astype(jnp.float32)

    if compute_dtype is not None:
        x2d = x2d.astype(compute_dtype)
        w1p = w1p.astype(compute_dtype)
        w2p = w2p.astype(compute_dtype)

    grid = (m_p // tm, hid_p // tk)

    # Explicit VMEM budget: double-buffered blocks + f32 accumulator scratch.
    est = 2 * (
        tm * in_p * x2d.dtype.itemsize
        + in_p * tk * w1p.dtype.itemsize
        + tk * 4
        + tk * out_p * w2p.dtype.itemsize
        + out_p * 4
        + tm * out_p * jnp.dtype(out_dtype).itemsize
    ) + tm * out_p * 4
    vmem_limit = int(min(max(2 * est, 32 * 1024 * 1024), 96 * 1024 * 1024))

    out2d = pl.pallas_call(
        mlp_kernel,
        out_shape=jax.ShapeDtypeStruct((m_p, out_p), out_dtype),
        grid_spec=pltpu.PrefetchScalarGridSpec(
            num_scalar_prefetch=0,
            grid=grid,
            in_specs=[
                pl.BlockSpec((tm, in_p), lambda i, k: (i, 0)),
                pl.BlockSpec((in_p, tk), lambda i, k: (0, k)),
                pl.BlockSpec((1, tk), lambda i, k: (0, k)),
                pl.BlockSpec((tk, out_p), lambda i, k: (k, 0)),
                pl.BlockSpec((1, out_p), lambda i, k: (0, 0)),
            ],
            out_specs=pl.BlockSpec((tm, out_p), lambda i, k: (i, 0)),
            scratch_shapes=[pltpu.VMEM((tm, out_p), jnp.float32)],
        ),
        compiler_params=pltpu.CompilerParams(
            dimension_semantics=("parallel", "arbitrary"),
            vmem_limit_bytes=vmem_limit,
        ),
    )(x2d, w1p, b1p, w2p, b2p)

    return out2d[:M, :out_f].reshape(B, T, out_f)


def init_linear_params(key, fan_in, fan_out, dtype=jnp.float32):
    """Deterministic init mirroring nn.Linear (kaiming-uniform-ish bounds)."""
    kw, kb = jax.random.split(key)
    bound = 1.0 / math.sqrt(fan_in)
    # Stored as (fan_in, fan_out) == W^T relative to PyTorch.
    w = jax.random.uniform(kw, (fan_in, fan_out), dtype, -bound, bound)
    b = jax.random.uniform(kb, (fan_out,), dtype, -bound, bound)
    return w, b


def mlp_reference(x, w1, b1, w2, b2):
    h = x @ w1 + b1
    h = 0.5 * h * (1.0 + jax.lax.erf(h * _INV_SQRT2))
    return h @ w2 + b2


if __name__ == "__main__":
    # Small shapes consistent with the module's forward:
    # (n_samples=2, n_patches+1=8, in_features=32), hidden=64, out=32.
    B, T, in_f, hid, out_f = 2, 8, 32, 64, 32

    key = jax.random.PRNGKey(0)
    kx, k1, k2 = jax.random.split(key, 3)

    x = jax.random.normal(kx, (B, T, in_f), jnp.float32)
    w1, b1 = init_linear_params(k1, in_f, hid)
    w2, b2 = init_linear_params(k2, hid, out_f)

    out = mlp_pallas(x, w1, b1, w2, b2)
    out = jax.block_until_ready(out)

    ref = mlp_reference(x, w1, b1, w2, b2)
    assert out.shape == (B, T, out_f)
    assert jnp.allclose(out, ref, atol=1e-4, rtol=1e-4)

    print("KERNEL_OK")
</pallas_src>

<mosaic_0001>
module attributes {stable_mosaic.version = 11 : i64} {
  func.func @mlp_kernel(%arg0: i32, %arg1: i32, %arg2: memref<16x128xf32, #tpu.memory_space<vmem>>, %arg3: memref<128x128xf32, #tpu.memory_space<vmem>>, %arg4: memref<1x128xf32, #tpu.memory_space<vmem>>, %arg5: memref<128x128xf32, #tpu.memory_space<vmem>>, %arg6: memref<1x128xf32, #tpu.memory_space<vmem>>, %arg7: memref<16x128xf32, #tpu.memory_space<vmem>>, %arg8: memref<16x128xf32, #tpu.memory_space<vmem>>) attributes {dimension_semantics = [#tpu.dimension_semantics<parallel>, #tpu.dimension_semantics<arbitrary>], iteration_bounds = array<i64: 1, 1>, scalar_prefetch = 0 : i64, scratch_operands = 1 : i64, tpu.core_type = #tpu.core_type<tc>, window_params = [{transform_indices = @transform_0, window_bounds = array<i64: 16, 128>}, {transform_indices = @transform_1, window_bounds = array<i64: 128, 128>}, {transform_indices = @transform_2, window_bounds = array<i64: 1, 128>}, {transform_indices = @transform_3, window_bounds = array<i64: 128, 128>}, {pipeline_mode = #tpu.pipeline_mode<synchronous>, transform_indices = @transform_4, window_bounds = array<i64: 1, 128>}, {transform_indices = @transform_5, window_bounds = array<i64: 16, 128>}]} {
    %c0_i32 = arith.constant 0 : i32
    %0 = arith.cmpi eq, %arg1, %c0_i32 : i32
    %1 = arith.extui %0 : i1 to i32
    %c0_i32_0 = arith.constant 0 : i32
    %2 = arith.cmpi ne, %1, %c0_i32_0 : i32
    scf.if %2 {
      %cst_18 = arith.constant 0.000000e+00 : f32
      %25 = vector.broadcast %cst_18 : f32 to vector<16x128xf32>
      %c0_19 = arith.constant 0 : index
      %c0_20 = arith.constant 0 : index
      %26 = vector.load %arg8[%c0_19, %c0_20] : memref<16x128xf32, #tpu.memory_space<vmem>>, vector<16x128xf32>
      tpu.vector_store %arg8[%c0_19, %c0_20], %25 {strides = array<i32>} : memref<16x128xf32, #tpu.memory_space<vmem>>, vector<16x128xf32>,
    } else {
    }
    %c0 = arith.constant 0 : index
    %c0_1 = arith.constant 0 : index
    %3 = vector.load %arg2[%c0, %c0_1] : memref<16x128xf32, #tpu.memory_space<vmem>>, vector<16x128xf32>
    %c0_2 = arith.constant 0 : index
    %c0_3 = arith.constant 0 : index
    %4 = vector.load %arg3[%c0_2, %c0_3] : memref<128x128xf32, #tpu.memory_space<vmem>>, vector<128x128xf32>
    %cst = arith.constant dense<0.000000e+00> : vector<16x128xf32>
    %5 = tpu.matmul %3, %4, %cst {dimension_numbers = #tpu.dot_dimension_numbers<[1], [0], [0], [1], [0, 0, 1, 1], [], []>} : vector<16x128xf32>, vector<128x128xf32>, vector<16x128xf32> -> vector<16x128xf32>
    %c0_4 = arith.constant 0 : index
    %c0_5 = arith.constant 0 : index
    %6 = vector.load %arg4[%c0_4, %c0_5] : memref<1x128xf32, #tpu.memory_space<vmem>>, vector<1x128xf32>
    %7 = vector.broadcast %6 : vector<1x128xf32> to vector<16x128xf32>
    %8 = arith.addf %5, %7 : vector<16x128xf32>
    %cst_6 = arith.constant 5.000000e-01 : f32
    %9 = vector.broadcast %cst_6 : f32 to vector<16x128xf32>
    %10 = arith.mulf %9, %8 : vector<16x128xf32>
    %cst_7 = arith.constant 0.707106769 : f32
    %11 = vector.broadcast %cst_7 : f32 to vector<16x128xf32>
    %12 = arith.mulf %8, %11 : vector<16x128xf32>
    %13 = math.erf %12 : vector<16x128xf32>
    %cst_8 = arith.constant 1.000000e+00 : f32
    %14 = vector.broadcast %cst_8 : f32 to vector<16x128xf32>
    %15 = arith.addf %14, %13 : vector<16x128xf32>
    %16 = arith.mulf %10, %15 : vector<16x128xf32>
    %c0_9 = arith.constant 0 : index
    %c0_10 = arith.constant 0 : index
    %17 = vector.load %arg8[%c0_9, %c0_10] : memref<16x128xf32, #tpu.memory_space<vmem>>, vector<16x128xf32>
    %c0_11 = arith.constant 0 : index
    %c0_12 = arith.constant 0 : index
    %18 = vector.load %arg5[%c0_11, %c0_12] : memref<128x128xf32, #tpu.memory_space<vmem>>, vector<128x128xf32>
    %cst_13 = arith.constant dense<0.000000e+00> : vector<16x128xf32>
    %19 = tpu.matmul %16, %18, %cst_13 {dimension_numbers = #tpu.dot_dimension_numbers<[1], [0], [0], [1], [0, 0, 1, 1], [], []>} : vector<16x128xf32>, vector<128x128xf32>, vector<16x128xf32> -> vector<16x128xf32>
    %20 = arith.addf %17, %19 : vector<16x128xf32>
    %c0_14 = arith.constant 0 : index
    %c0_15 = arith.constant 0 : index
    %21 = vector.load %arg8[%c0_14, %c0_15] : memref<16x128xf32, #tpu.memory_space<vmem>>, vector<16x128xf32>
    tpu.vector_store %arg8[%c0_14, %c0_15], %20 {strides = array<i32>} : memref<16x128xf32, #tpu.memory_space<vmem>>, vector<16x128xf32>,
    %c0_i32_16 = arith.constant 0 : i32
    %22 = arith.cmpi eq, %arg1, %c0_i32_16 : i32
    %23 = arith.extui %22 : i1 to i32
    %c0_i32_17 = arith.constant 0 : i32
    %24 = arith.cmpi ne, %23, %c0_i32_17 : i32
    scf.if %24 {
      %c0_18 = arith.constant 0 : index
      %c0_19 = arith.constant 0 : index
      %25 = vector.load %arg8[%c0_18, %c0_19] : memref<16x128xf32, #tpu.memory_space<vmem>>, vector<16x128xf32>
      %c0_20 = arith.constant 0 : index
      %c0_21 = arith.constant 0 : index
      %26 = vector.load %arg6[%c0_20, %c0_21] : memref<1x128xf32, #tpu.memory_space<vmem>>, vector<1x128xf32>
      %27 = vector.broadcast %26 : vector<1x128xf32> to vector<16x128xf32>
      %28 = arith.addf %25, %27 : vector<16x128xf32>
      %c0_22 = arith.constant 0 : index
      %c0_23 = arith.constant 0 : index
      %29 = vector.load %arg7[%c0_22, %c0_23] : memref<16x128xf32, #tpu.memory_space<vmem>>, vector<16x128xf32>
      tpu.vector_store %arg7[%c0_22, %c0_23], %28 {strides = array<i32>} : memref<16x128xf32, #tpu.memory_space<vmem>>, vector<16x128xf32>,
    } else {
    }
    return
  }
  func.func @transform_0(%arg0: i32, %arg1: i32) -> (i32, i32) {
    %c0_i32 = arith.constant 0 : i32
    %c0_i32_0 = arith.constant 0 : i32
    return %arg0, %c0_i32 : i32, i32
  }
  func.func @transform_1(%arg0: i32, %arg1: i32) -> (i32, i32) {
    %c0_i32 = arith.constant 0 : i32
    %c0_i32_0 = arith.constant 0 : i32
    return %c0_i32, %arg1 : i32, i32
  }
  func.func @transform_2(%arg0: i32, %arg1: i32) -> (i32, i32) {
    %c0_i32 = arith.constant 0 : i32
    %c0_i32_0 = arith.constant 0 : i32
    return %c0_i32, %arg1 : i32, i32
  }
  func.func @transform_3(%arg0: i32, %arg1: i32) -> (i32, i32) {
    %c0_i32 = arith.constant 0 : i32
    %c0_i32_0 = arith.constant 0 : i32
    return %arg1, %c0_i32 : i32, i32
  }
  func.func @transform_4(%arg0: i32, %arg1: i32) -> (i32, i32) {
    %c0_i32 = arith.constant 0 : i32
    %c0_i32_0 = arith.constant 0 : i32
    %c0_i32_1 = arith.constant 0 : i32
    return %c0_i32, %c0_i32_0 : i32, i32
  }
  func.func @transform_5(%arg0: i32, %arg1: i32) -> (i32, i32) {
    %c0_i32 = arith.constant 0 : i32
    %c0_i32_0 = arith.constant 0 : i32
    return %arg0, %c0_i32 : i32, i32
  }
}

</mosaic_0001>

<llo_original>
// kernel: tpu_custom_call.1
$region0: #{tpu_custom_call.1}
  #allocation0 [shape = 'u32[]', space=smem, size = 0x4, offset = 0x4, fixed_abs, tag = 'smem constant byte address 0x4 - core index']
  #allocation1 [shape = 'u32[72,128]{1,0:T(1,128)}', space=vmem, size = 0x9000, scoped, tag = 'internal scratch']
  #allocation2 [shape = 'f32[16,128]{1,0:T(8,128)}', space=vmem, size = 0x2000, scoped, tag = 'scratch operand']
  %s0 = inlined_call_operand.hbm [shape: f32[16,128], index: 0, kind: input, shape index: {}]
  %s1 = inlined_call_operand.hbm [shape: f32[128,128], index: 1, kind: input, shape index: {}]
  %s2 = inlined_call_operand.vmem [shape: f32[1,128], index: 2, kind: input, shape index: {}]
  %s3 = inlined_call_operand.hbm [shape: f32[128,128], index: 3, kind: input, shape index: {}]
  %s4 = inlined_call_operand.vmem [shape: f32[1,128], index: 4, kind: input, shape index: {}]
  %s5 = inlined_call_operand.hbm [shape: f32[16,128], index: 5, kind: output, shape index: {}]
  %s6 = sld [smem:[#allocation0]]
  $region50: #{tpu_custom_call.1} parent=0
    _
  %s8 = ssub.s32 1, %s6
  %s9 = scalar_select 0, %s8, %s6
  $region1: #{tpu_custom_call.1} parent=0
    #allocation3 [shape = 'u8[8192]{0}', space=vmem, size = 0x2000, scoped, tag = 'input window, operand 0, single buffered']
    #allocation4 [shape = 's32[1]{0}', space=sflag, size = 0x4, scoped, tag = 'scoped memory for tpu_custom_call.1']
    #allocation5 [shape = 's32[1]{0}', space=sflag, size = 0x4, scoped, tag = 'scoped memory for tpu_custom_call.1']
    #allocation6 [shape = 'u8[65536]{0}', space=vmem, size = 0x10000, scoped, tag = 'input window, operand 1, single buffered']
    #allocation7 [shape = 's32[1]{0}', space=sflag, size = 0x4, scoped, tag = 'scoped memory for tpu_custom_call.1']
    #allocation8 [shape = 'u8[65536]{0}', space=vmem, size = 0x10000, scoped, tag = 'input window, operand 3, single buffered']
    #allocation9 [shape = 'u8[8192]{0}', space=vmem, size = 0x2000, scoped, tag = 'output window, operand 0, single buffered']
    %10 = vsyncpa [#allocation4], 0
    %11 = vsyncpa [#allocation7], 0
    %12 = vsyncpa [#allocation5], 0
    // Predicated region
    $region2: #{tpu_custom_call.1} parent=1 // pred_check
      _
    $region3: #{tpu_custom_call.1} parent=1 // pred_check_branch
      %14 = sbr.rel (0) target = $region5
    $region4: #{tpu_custom_call.1} parent=1 // pred_region
      %16 = vsyncadd [#allocation4], 0
      %s17 = sshll.u32 %s0, 4
      %s18 = int_to_ptr.hbm [resolvable:$true] %s17
      %s19 = sshll.u32 [#allocation3], 4
      %s20 = int_to_ptr.vmem [resolvable:$true] %s19
      %25 = dma.hbm_to_vmem [thread:$0]  %s18, 256, %s20, [#allocation4], 128, 128, 8
    $region5: #{tpu_custom_call.1} parent=1 // pred_fallthru
      _
    // Predicated region
    $region6: #{tpu_custom_call.1} parent=1 // pred_check
      _
    $region7: #{tpu_custom_call.1} parent=1 // pred_check_branch
      %27 = sbr.rel (0) target = $region9
    $region8: #{tpu_custom_call.1} parent=1 // pred_region
      %29 = vsyncadd [#allocation7], 0
      %s30 = sshll.u32 %s1, 4
      %s31 = int_to_ptr.hbm [resolvable:$true] %s30
      %s32 = sshll.u32 [#allocation6], 4
      %s33 = int_to_ptr.vmem [resolvable:$true] %s32
      %38 = dma.hbm_to_vmem [thread:$0]  %s31, 2048, %s33, [#allocation7], 128, 128, 8
    $region9: #{tpu_custom_call.1} parent=1 // pred_fallthru
      _
    // Predicated region
    $region10: #{tpu_custom_call.1} parent=1 // pred_check
      _
    $region11: #{tpu_custom_call.1} parent=1 // pred_check_branch
      %40 = sbr.rel (0) target = $region13
    $region12: #{tpu_custom_call.1} parent=1 // pred_region
      _
    $region13: #{tpu_custom_call.1} parent=1 // pred_fallthru
      _
    // Predicated region
    $region14: #{tpu_custom_call.1} parent=1 // pred_check
      _
    $region15: #{tpu_custom_call.1} parent=1 // pred_check_branch
      %42 = sbr.rel (0) target = $region17
    $region16: #{tpu_custom_call.1} parent=1 // pred_region
      %44 = vsyncadd [#allocation7], 0
      %s45 = sshll.u32 %s3, 4
      %s46 = int_to_ptr.hbm [resolvable:$true] %s45
      %s47 = sshll.u32 [#allocation8], 4
      %s48 = int_to_ptr.vmem [resolvable:$true] %s47
      %53 = dma.hbm_to_vmem [thread:$0]  %s46, 2048, %s48, [#allocation7], 128, 128, 8
    $region17: #{tpu_custom_call.1} parent=1 // pred_fallthru
      _
    // Predicated region
    $region18: #{tpu_custom_call.1} parent=1 // pred_check
      _
    $region19: #{tpu_custom_call.1} parent=1 // pred_check_branch
      %55 = sbr.rel (0) target = $region21
    $region20: #{tpu_custom_call.1} parent=1 // pred_region
      _
    $region21: #{tpu_custom_call.1} parent=1 // pred_fallthru
      _
    // Predicated region
    $region22: #{tpu_custom_call.1} parent=1 // pred_check
      _
    $region23: #{tpu_custom_call.1} parent=1 // pred_check_branch
      %57 = sbr.rel (0) target = $region25
    $region24: #{tpu_custom_call.1} parent=1 // pred_region
      %59 = dma.done [#allocation4], 256
    $region25: #{tpu_custom_call.1} parent=1 // pred_fallthru
      _
    // Predicated region
    $region26: #{tpu_custom_call.1} parent=1 // pred_check
      _
    $region27: #{tpu_custom_call.1} parent=1 // pred_check_branch
      %61 = sbr.rel (0) target = $region29
    $region28: #{tpu_custom_call.1} parent=1 // pred_region
      %63 = dma.done [#allocation7], 2048
    $region29: #{tpu_custom_call.1} parent=1 // pred_fallthru
      _
    // Predicated region
    $region30: #{tpu_custom_call.1} parent=1 // pred_check
      _
    $region31: #{tpu_custom_call.1} parent=1 // pred_check_branch
      %65 = sbr.rel (0) target = $region33
    $region32: #{tpu_custom_call.1} parent=1 // pred_region
      %67 = dma.done [#allocation7], 2048
    $region33: #{tpu_custom_call.1} parent=1 // pred_fallthru
      _
    %p68 = scmp.eq.s32.totalorder 0, 0
    // Predicated region
    $region34: #{tpu_custom_call.1} parent=1 // pred_check
      %p69 = pneg %p68
    $region35: #{tpu_custom_call.1} parent=1 // pred_check_branch
      %71 = sbr.rel (%p69) target = $region37
    $region36: #{tpu_custom_call.1} parent=1 // pred_region
      %72 = vst [vmem:[#allocation2] sm:$0xff] 0.0
      %73 = vst [vmem:[#allocation2 + $0x8] sm:$0xff] 0.0
    $region37: #{tpu_custom_call.1} parent=1 // pred_fallthru
      _
    %v74 = vld [vmem:[#allocation3] sm:$0xff]
    %v75 = vld [vmem:[#allocation3 + $0x8] sm:$0xff]
    %v76 = vld [vmem:[#allocation6] sm:$0xff]
    %v77 = vld [vmem:[#allocation6 + $0x8] sm:$0xff]
    %v78 = vld [vmem:[#allocation6 + $0x10] sm:$0xff]
    %v79 = vld [vmem:[#allocation6 + $0x18] sm:$0xff]
    %v80 = vld [vmem:[#allocation6 + $0x20] sm:$0xff]
    %v81 = vld [vmem:[#allocation6 + $0x28] sm:$0xff]
    %v82 = vld [vmem:[#allocation6 + $0x30] sm:$0xff]
    %v83 = vld [vmem:[#allocation6 + $0x38] sm:$0xff]
    %v84 = vld [vmem:[#allocation6 + $0x40] sm:$0xff]
    %v85 = vld [vmem:[#allocation6 + $0x48] sm:$0xff]
    %v86 = vld [vmem:[#allocation6 + $0x50] sm:$0xff]
    %v87 = vld [vmem:[#allocation6 + $0x58] sm:$0xff]
    %v88 = vld [vmem:[#allocation6 + $0x60] sm:$0xff]
    %v89 = vld [vmem:[#allocation6 + $0x68] sm:$0xff]
    %v90 = vld [vmem:[#allocation6 + $0x70] sm:$0xff]
    %v91 = vld [vmem:[#allocation6 + $0x78] sm:$0xff]
    %v92 = vld [vmem:[%s2] sm:$0x1]
    %v94 = vperm.slane %v92, 0
    %96 = vmatpush.msra.mxu0 %v91
    %97 = vmatpush.msra.mxu0 %v90
    %98 = vmatpush.msra.mxu0 %v89
    %99 = vmatpush.msra.mxu0 %v88
    %100 = vmatpush.msra.mxu0 %v87
    %101 = vmatpush.msra.mxu0 %v86
    %102 = vmatpush.msra.mxu0 %v85
    %103 = vmatpush.msra.mxu0 %v84
    %104 = vmatpush.msra.mxu0 %v83
    %105 = vmatpush.msra.mxu0 %v82
    %106 = vmatpush.msra.mxu0 %v81
    %107 = vmatpush.msra.mxu0 %v80
    %108 = vmatpush.msra.mxu0 %v79
    %109 = vmatpush.msra.mxu0 %v78
    %110 = vmatpush.msra.mxu0 %v77
    %111 = vmatpush.msra.mxu0 %v76
    %112 = vmatmul.f32.gmra.mxu0 %v74
    %v113 = vpop.f32.mrf.mxu0
    %v114 = vadd.f32 %v94, %v113
    %115 = vmatmul.f32.gmra.mxu0 %v75
    %v116 = vpop.f32.mrf.mxu0
    %v117 = vadd.f32 %v94, %v116
    %118 = vdwg.mxu0
    %v119 = vmul.f32 %v114, 0.5
    %v120 = vmul.f32 %v117, 0.5
    %v121 = vmul.f32 %v114, 0.70710677
    %v122 = vmul.f32 %v117, 0.70710677
    %v123 = vmul.f32 %v121, %v121
    %v124 = vmin.f32 16.0, %v123
    %v125 = vmul.f32 %v124, 2.1237322e-06
    %v126 = vadd.f32 %v125, 0.00028619796
    %v127 = vmul.f32 %v124, %v126
    %v128 = vadd.f32 %v127, 0.0036580483
    %v129 = vmul.f32 %v124, %v128
    %v130 = vadd.f32 %v129, 0.05243302
    %v131 = vmul.f32 %v124, %v130
    %v132 = vadd.f32 %v131, 0.18741608
    %v133 = vmul.f32 %v124, %v132
    %v134 = vadd.f32 %v133, 1.1283791
    %v135 = vmul.f32 %v121, %v134
    %v136 = vmul.f32 %v124, 3.8918573e-05
    %v137 = vadd.f32 %v136, 0.001143296
    %v138 = vmul.f32 %v124, %v137
    %v139 = vadd.f32 %v138, 0.014752088
    %v140 = vmul.f32 %v124, %v139
    %v141 = vadd.f32 %v140, 0.112945676
    %v142 = vmul.f32 %v124, %v141
    %v143 = vadd.f32 %v142, 0.4994258
    %v144 = vmul.f32 %v124, %v143
    %v145 = vadd.f32 %v144, 1.0
    %v146 = vrcp.pop %v145
    %v147 = vmul.f32 %v145, %v146
    %v148 = vsub.f32 1.0, %v147
    %v149 = vmul.f32 %v146, %v148
    %v150 = vadd.f32 %v146, %v149
    %vm151 = vweird.f32 %v145
    %vm152 = vweird.f32 %v146
    %vm153 = vmor %vm151, %vm152
    %v154 = vsel %vm153, %v146, %v150
    %v155 = vand.u32 2147483647, %v145
    %vm156 = vcmp.eq.f32.partialorder %v155, 8.507059e+37
    %v157 = vand.u32 %v145, 2147483648
    %v158 = vor.u32 1.1754944e-38, %v157
    %v159 = vsel %vm156, %v158, %v154
    %v160 = vmul.f32 %v135, %v159
    %v161 = vmin.f32 %v160, 1.0
    %v162 = vmax.f32 %v161, -1.0
    %v163 = vmul.f32 %v122, %v122
    %v164 = vmin.f32 16.0, %v163
    %v165 = vmul.f32 %v164, 2.1237322e-06
    %v166 = vadd.f32 %v165, 0.00028619796
    %v167 = vmul.f32 %v164, %v166
    %v168 = vadd.f32 %v167, 0.0036580483
    %v169 = vmul.f32 %v164, %v168
    %v170 = vadd.f32 %v169, 0.05243302
    %v171 = vmul.f32 %v164, %v170
    %v172 = vadd.f32 %v171, 0.18741608
    %v173 = vmul.f32 %v164, %v172
    %v174 = vadd.f32 %v173, 1.1283791
    %v175 = vmul.f32 %v122, %v174
    %v176 = vmul.f32 %v164, 3.8918573e-05
    %v177 = vadd.f32 %v176, 0.001143296
    %v178 = vmul.f32 %v164, %v177
    %v179 = vadd.f32 %v178, 0.014752088
    %v180 = vmul.f32 %v164, %v179
    %v181 = vadd.f32 %v180, 0.112945676
    %v182 = vmul.f32 %v164, %v181
    %v183 = vadd.f32 %v182, 0.4994258
    %v184 = vmul.f32 %v164, %v183
    %v185 = vadd.f32 %v184, 1.0
    %v186 = vrcp.pop %v185
    %v187 = vmul.f32 %v185, %v186
    %v188 = vsub.f32 1.0, %v187
    %v189 = vmul.f32 %v186, %v188
    %v190 = vadd.f32 %v186, %v189
    %vm191 = vweird.f32 %v185
    %vm192 = vweird.f32 %v186
    %vm193 = vmor %vm191, %vm192
    %v194 = vsel %vm193, %v186, %v190
    %v195 = vand.u32 2147483647, %v185
    %vm196 = vcmp.eq.f32.partialorder %v195, 8.507059e+37
    %v197 = vand.u32 %v185, 2147483648
    %v198 = vor.u32 1.1754944e-38, %v197
    %v199 = vsel %vm196, %v198, %v194
    %v200 = vmul.f32 %v175, %v199
    %v201 = vmin.f32 %v200, 1.0
    %v202 = vmax.f32 %v201, -1.0
    %v203 = vadd.f32 %v162, 1.0
    %v204 = vadd.f32 %v202, 1.0
    %v205 = vmul.f32 %v119, %v203
    %v206 = vmul.f32 %v120, %v204
    %v207 = vld [vmem:[#allocation2] sm:$0xff]
    %v208 = vld [vmem:[#allocation2 + $0x8] sm:$0xff]
    %v209 = vld [vmem:[#allocation8] sm:$0xff]
    %v210 = vld [vmem:[#allocation8 + $0x8] sm:$0xff]
    %v211 = vld [vmem:[#allocation8 + $0x10] sm:$0xff]
    %v212 = vld [vmem:[#allocation8 + $0x18] sm:$0xff]
    %v213 = vld [vmem:[#allocation8 + $0x20] sm:$0xff]
    %v214 = vld [vmem:[#allocation8 + $0x28] sm:$0xff]
    %v215 = vld [vmem:[#allocation8 + $0x30] sm:$0xff]
    %v216 = vld [vmem:[#allocation8 + $0x38] sm:$0xff]
    %v217 = vld [vmem:[#allocation8 + $0x40] sm:$0xff]
    %v218 = vld [vmem:[#allocation8 + $0x48] sm:$0xff]
    %v219 = vld [vmem:[#allocation8 + $0x50] sm:$0xff]
    %v220 = vld [vmem:[#allocation8 + $0x58] sm:$0xff]
    %v221 = vld [vmem:[#allocation8 + $0x60] sm:$0xff]
    %v222 = vld [vmem:[#allocation8 + $0x68] sm:$0xff]
    %v223 = vld [vmem:[#allocation8 + $0x70] sm:$0xff]
    %v224 = vld [vmem:[#allocation8 + $0x78] sm:$0xff]
    %225 = vmatpush.msra.mxu0 %v224
    %226 = vmatpush.msra.mxu0 %v223
    %227 = vmatpush.msra.mxu0 %v222
    %228 = vmatpush.msra.mxu0 %v221
    %229 = vmatpush.msra.mxu0 %v220
    %230 = vmatpush.msra.mxu0 %v219
    %231 = vmatpush.msra.mxu0 %v218
    %232 = vmatpush.msra.mxu0 %v217
    %233 = vmatpush.msra.mxu0 %v216
    %234 = vmatpush.msra.mxu0 %v215
    %235 = vmatpush.msra.mxu0 %v214
    %236 = vmatpush.msra.mxu0 %v213
    %237 = vmatpush.msra.mxu0 %v212
    %238 = vmatpush.msra.mxu0 %v211
    %239 = vmatpush.msra.mxu0 %v210
    %240 = vmatpush.msra.mxu0 %v209
    %241 = vmatmul.f32.gmra.mxu0 %v205
    %v242 = vpop.f32.mrf.mxu0
    %v243 = vadd.f32 0.0, %v242
    %244 = vmatmul.f32.gmra.mxu0 %v206
    %v245 = vpop.f32.mrf.mxu0
    %v246 = vadd.f32 0.0, %v245
    %247 = vdwg.mxu0
    %v248 = vadd.f32 %v207, %v243
    %v249 = vadd.f32 %v208, %v246
    %250 = vst [vmem:[#allocation2] sm:$0xff] %v248
    %251 = vst [vmem:[#allocation2 + $0x8] sm:$0xff] %v249
    // Predicated region
    $region38: #{tpu_custom_call.1} parent=1 // pred_check
      %p252 = pneg %p68
    $region39: #{tpu_custom_call.1} parent=1 // pred_check_branch
      %254 = sbr.rel (%p252) target = $region41
    $region40: #{tpu_custom_call.1} parent=1 // pred_region
      %v255 = vld [vmem:[#allocation2] sm:$0xff]
      %v256 = vld [vmem:[#allocation2 + $0x8] sm:$0xff]
      %v257 = vld [vmem:[%s4] sm:$0x1]
      %v259 = vperm.slane %v257, 0
      %v261 = vadd.f32 %v255, %v259
      %v262 = vadd.f32 %v256, %v259
      %263 = vst [vmem:[#allocation9] sm:$0xff] %v261
      %264 = vst [vmem:[#allocation9 + $0x8] sm:$0xff] %v262
    $region41: #{tpu_custom_call.1} parent=1 // pred_fallthru
      _
    // Predicated region
    $region42: #{tpu_custom_call.1} parent=1 // pred_check
      _
    $region43: #{tpu_custom_call.1} parent=1 // pred_check_branch
      %266 = sbr.rel (0) target = $region45
    $region44: #{tpu_custom_call.1} parent=1 // pred_region
      %268 = vsyncadd [#allocation5], 0
      %s269 = sshll.u32 [#allocation9], 4
      %s270 = int_to_ptr.vmem [resolvable:$true] %s269
      %s271 = sshll.u32 %s5, 4
      %s272 = int_to_ptr.hbm [resolvable:$true] %s271
      %277 = dma.vmem_to_hbm [thread:$0]  %s270, 256, %s272, [#allocation5], 128, 128, 8
    $region45: #{tpu_custom_call.1} parent=1 // pred_fallthru
      _
    // Predicated region
    $region46: #{tpu_custom_call.1} parent=1 // pred_check
      _
    $region47: #{tpu_custom_call.1} parent=1 // pred_check_branch
      %279 = sbr.rel (0) target = $region49
    $region48: #{tpu_custom_call.1} parent=1 // pred_region
      %281 = dma.done [#allocation5], 256
    $region49: #{tpu_custom_call.1} parent=1 // pred_fallthru
      _
    %282 = vsyncpa [#allocation4], 1
    %283 = vsyncpa [#allocation7], 1
    %284 = vsyncpa [#allocation5], 1

</llo_original>
